<compile_context>
chip_gen: v7x
topology: tpu7x:2x2x1
jax: 0.10.0
libtpu: 0.0.40
codegen_flags: <defaults>
</compile_context>

<pallas_src>
import jax
import jax.numpy as jnp
from jax.experimental import pallas as pl
from jax.experimental.pallas import tpu as pltpu


def _round_up(x, m):
    return (x + m - 1) // m * m


def patch_embed_kernel(x_ref, w_ref, b_ref, o_ref):
    # x_ref: (TM, K) patches, w_ref: (K, Ep), b_ref: (1, Ep), o_ref: (TM, Ep)
    acc = jnp.dot(x_ref[...], w_ref[...], preferred_element_type=jnp.float32)
    o_ref[...] = (acc + b_ref[...]).astype(o_ref.dtype)


def patch_embed(x, weight, bias, patch_size, *, compute_dtype=None, tm_max=256):
    """x: (B, C, H, W); weight: (E, C, P, P); bias: (E,).

    compute_dtype: optional dtype (e.g. jnp.bfloat16) for the matmul operands;
    accumulation and bias add are always f32, output keeps x.dtype.
    tm_max: max rows per grid step (256 = MXU-aligned, VMEM-safe on v7x too).
    """
    B, C, H, W = x.shape
    E = weight.shape[0]
    P = patch_size
    gh, gw = H // P, W // P
    N = gh * gw

    # --- patch extraction (matches nn.Conv2d(kernel=stride=P) on NCHW) ---
    # (B, C, gh, P, gw, P) -> (B, gh, gw, C, P, P) -> (B*N, C*P*P), row order
    # (c, ph, pw) so it lines up with weight.reshape(E, C*P*P).
    # TODO(synk): fuse this transpose into the kernel (NHWC input or in-kernel
    # gather / allow_input_fusion) to avoid one extra HBM pass over x.
    patches = x.reshape(B, C, gh, P, gw, P)
    patches = jnp.transpose(patches, (0, 2, 4, 1, 3, 5)).reshape(B * N, C * P * P)

    w_mat = weight.reshape(E, C * P * P).T            # (K, E)
    b_mat = bias.reshape(1, E).astype(jnp.float32)    # bias add stays f32

    M, K = patches.shape
    out_dtype = x.dtype

    if compute_dtype is not None:
        patches = patches.astype(compute_dtype)
        w_mat = w_mat.astype(compute_dtype)

    # Lane-dense output: pad embed dim to a multiple of 128 (unmasked stores).
    Ep = _round_up(E, 128)
    if Ep != E:
        w_mat = jnp.pad(w_mat, ((0, 0), (0, Ep - E)))
        b_mat = jnp.pad(b_mat, ((0, 0), (0, Ep - E)))

    # Tile the patch dimension. TM multiple of 8 (sublane aligned), capped at
    # tm_max so double-buffered x/out tiles stay well inside VMEM on both
    # v5e/v6e (128 MiB) and v7x (64 MiB) even for ViT-sized K/E.
    TM = min(tm_max, _round_up(M, 8))
    Mp = _round_up(M, TM)
    if Mp != M:
        patches = jnp.pad(patches, ((0, Mp - M), (0, 0)))

    in_itemsize = patches.dtype.itemsize
    cost = pl.CostEstimate(
        flops=2 * Mp * K * Ep,
        transcendentals=0,
        bytes_accessed=(Mp * K + K * Ep) * in_itemsize
        + Ep * 4
        + Mp * Ep * jnp.dtype(out_dtype).itemsize,
    )

    out = pl.pallas_call(
        patch_embed_kernel,
        out_shape=jax.ShapeDtypeStruct((Mp, Ep), out_dtype),
        grid_spec=pltpu.PrefetchScalarGridSpec(
            num_scalar_prefetch=0,
            grid=(Mp // TM,),
            in_specs=[
                pl.BlockSpec((TM, K), lambda i: (i, 0)),
                pl.BlockSpec((K, Ep), lambda i: (0, 0)),   # resident, DMA'd once
                pl.BlockSpec((1, Ep), lambda i: (0, 0)),   # resident, DMA'd once
            ],
            out_specs=pl.BlockSpec((TM, Ep), lambda i: (i, 0)),
        ),
        compiler_params=pltpu.CompilerParams(
            dimension_semantics=("parallel",),
        ),
        cost_estimate=cost,
    )(patches, w_mat, b_mat)

    return out[:M, :E].reshape(B, N, E)


if __name__ == "__main__":
    # Small shapes consistent with the module's forward:
    # img_size=(16, 16), patch_size=4, in_chans=4, embed_dim=32
    B, C, H, W = 2, 4, 16, 16
    P, E = 4, 32

    key = jax.random.PRNGKey(0)
    kx, kw, kb = jax.random.split(key, 3)
    x = jax.random.normal(kx, (B, C, H, W), dtype=jnp.float32)
    weight = jax.random.normal(kw, (E, C, P, P), dtype=jnp.float32) * 0.02
    bias = jax.random.normal(kb, (E,), dtype=jnp.float32) * 0.02

    # Reference: nn.Conv2d(kernel=stride=P) on NCHW, then flatten(2).transpose(1,2).
    ref = jax.lax.conv_general_dilated(
        x, weight, window_strides=(P, P), padding="VALID",
        dimension_numbers=("NCHW", "OIHW", "NCHW"),
    ) + bias.reshape(1, E, 1, 1)
    ref = ref.reshape(B, E, -1).transpose(0, 2, 1)

    # f32 path (same semantics as the PyTorch module).
    out = jax.block_until_ready(patch_embed(x, weight, bias, P))
    assert out.shape == (B, (H // P) * (W // P), E), out.shape
    assert jnp.allclose(out, ref, atol=1e-4, rtol=1e-4), "f32 mismatch vs reference"

    # bf16-fed MXU path (fast path on v6e/v7x): f32 accumulate + f32 bias add.
    out_bf16 = jax.block_until_ready(
        patch_embed(x, weight, bias, P, compute_dtype=jnp.bfloat16))
    assert jnp.allclose(out_bf16, ref, atol=3e-2, rtol=3e-2), "bf16 mismatch vs reference"

    print("KERNEL_OK")
</pallas_src>

<mosaic_0001>
module attributes {stable_mosaic.version = 11 : i64} {
  func.func @patch_embed_kernel(%arg0: i32, %arg1: memref<32x64xf32, #tpu.memory_space<vmem>>, %arg2: memref<64x128xf32, #tpu.memory_space<vmem>>, %arg3: memref<1x128xf32, #tpu.memory_space<vmem>>, %arg4: memref<32x128xf32, #tpu.memory_space<vmem>>) attributes {dimension_semantics = [#tpu.dimension_semantics<parallel>], iteration_bounds = array<i64: 1>, scalar_prefetch = 0 : i64, scratch_operands = 0 : i64, tpu.core_type = #tpu.core_type<tc>, window_params = [{transform_indices = @transform_0, window_bounds = array<i64: 32, 64>}, {pipeline_mode = #tpu.pipeline_mode<synchronous>, transform_indices = @transform_1, window_bounds = array<i64: 64, 128>}, {pipeline_mode = #tpu.pipeline_mode<synchronous>, transform_indices = @transform_2, window_bounds = array<i64: 1, 128>}, {transform_indices = @transform_3, window_bounds = array<i64: 32, 128>}]} {
    %c0 = arith.constant 0 : index
    %c0_0 = arith.constant 0 : index
    %0 = vector.load %arg1[%c0, %c0_0] : memref<32x64xf32, #tpu.memory_space<vmem>>, vector<32x64xf32>
    %c0_1 = arith.constant 0 : index
    %c0_2 = arith.constant 0 : index
    %1 = vector.load %arg2[%c0_1, %c0_2] : memref<64x128xf32, #tpu.memory_space<vmem>>, vector<64x128xf32>
    %cst = arith.constant dense<0.000000e+00> : vector<32x128xf32>
    %2 = tpu.matmul %0, %1, %cst {dimension_numbers = #tpu.dot_dimension_numbers<[1], [0], [0], [1], [0, 0, 1, 1], [], []>} : vector<32x64xf32>, vector<64x128xf32>, vector<32x128xf32> -> vector<32x128xf32>
    %c0_3 = arith.constant 0 : index
    %c0_4 = arith.constant 0 : index
    %3 = vector.load %arg3[%c0_3, %c0_4] : memref<1x128xf32, #tpu.memory_space<vmem>>, vector<1x128xf32>
    %4 = vector.broadcast %3 : vector<1x128xf32> to vector<32x128xf32>
    %5 = arith.addf %2, %4 : vector<32x128xf32>
    %c0_5 = arith.constant 0 : index
    %c0_6 = arith.constant 0 : index
    %6 = vector.load %arg4[%c0_5, %c0_6] : memref<32x128xf32, #tpu.memory_space<vmem>>, vector<32x128xf32>
    tpu.vector_store %arg4[%c0_5, %c0_6], %5 {strides = array<i32>} : memref<32x128xf32, #tpu.memory_space<vmem>>, vector<32x128xf32>,
    return
  }
  func.func @transform_0(%arg0: i32) -> (i32, i32) {
    %c0_i32 = arith.constant 0 : i32
    %c0_i32_0 = arith.constant 0 : i32
    return %arg0, %c0_i32 : i32, i32
  }
  func.func @transform_1(%arg0: i32) -> (i32, i32) {
    %c0_i32 = arith.constant 0 : i32
    %c0_i32_0 = arith.constant 0 : i32
    %c0_i32_1 = arith.constant 0 : i32
    return %c0_i32, %c0_i32_0 : i32, i32
  }
  func.func @transform_2(%arg0: i32) -> (i32, i32) {
    %c0_i32 = arith.constant 0 : i32
    %c0_i32_0 = arith.constant 0 : i32
    %c0_i32_1 = arith.constant 0 : i32
    return %c0_i32, %c0_i32_0 : i32, i32
  }
  func.func @transform_3(%arg0: i32) -> (i32, i32) {
    %c0_i32 = arith.constant 0 : i32
    %c0_i32_0 = arith.constant 0 : i32
    return %arg0, %c0_i32 : i32, i32
  }
}

</mosaic_0001>

<llo_original>
// kernel: tpu_custom_call.1
$region0: #{tpu_custom_call.1}
  #allocation0 [shape = 'u32[]', space=smem, size = 0x4, offset = 0x4, fixed_abs, tag = 'smem constant byte address 0x4 - core index']
  #allocation1 [shape = 'u32[144,128]{1,0:T(1,128)}', space=vmem, size = 0x12000, scoped, tag = 'internal scratch']
  %s0 = inlined_call_operand.hbm [shape: f32[32,64], index: 0, kind: input, shape index: {}]
  %s1 = inlined_call_operand.hbm [shape: f32[64,128], index: 1, kind: input, shape index: {}]
  %s2 = inlined_call_operand.vmem [shape: f32[1,128], index: 2, kind: input, shape index: {}]
  %s3 = inlined_call_operand.hbm [shape: f32[32,128], index: 3, kind: output, shape index: {}]
  %s4 = sld [smem:[#allocation0]]
  $region30: #{tpu_custom_call.1} parent=0
    _
  %s6 = ssub.s32 1, %s4
  %s7 = scalar_select 0, %s6, %s4
  $region1: #{tpu_custom_call.1} parent=0
    #allocation2 [shape = 'u8[16384]{0}', space=vmem, size = 0x4000, scoped, tag = 'input window, operand 0, single buffered']
    #allocation3 [shape = 's32[1]{0}', space=sflag, size = 0x4, scoped, tag = 'scoped memory for tpu_custom_call.1']
    #allocation4 [shape = 's32[1]{0}', space=sflag, size = 0x4, scoped, tag = 'scoped memory for tpu_custom_call.1']
    #allocation5 [shape = 'u8[32768]{0}', space=vmem, size = 0x8000, scoped, tag = 'input window, operand 1, single buffered']
    #allocation6 [shape = 's32[1]{0}', space=sflag, size = 0x4, scoped, tag = 'scoped memory for tpu_custom_call.1']
    #allocation7 [shape = 'u8[16384]{0}', space=vmem, size = 0x4000, scoped, tag = 'output window, operand 0, single buffered']
    %8 = vsyncpa [#allocation3], 0
    %9 = vsyncpa [#allocation6], 0
    %10 = vsyncpa [#allocation4], 0
    // Predicated region
    $region2: #{tpu_custom_call.1} parent=1 // pred_check
      _
    $region3: #{tpu_custom_call.1} parent=1 // pred_check_branch
      %12 = sbr.rel (0) target = $region5
    $region4: #{tpu_custom_call.1} parent=1 // pred_region
      %s14 = ssub.s32 512, 512
      %15 = vsyncadd [#allocation3], %s14
      %s16 = sshll.u32 [#allocation2], 4
      %s17 = int_to_ptr.vmem [resolvable:$true] %s16
      %22 = dma.hbm_to_vmem [thread:$0]  %s0, 512, %s17, [#allocation3], 128, 128, 8
    $region5: #{tpu_custom_call.1} parent=1 // pred_fallthru
      _
    // Predicated region
    $region6: #{tpu_custom_call.1} parent=1 // pred_check
      _
    $region7: #{tpu_custom_call.1} parent=1 // pred_check_branch
      %24 = sbr.rel (0) target = $region9
    $region8: #{tpu_custom_call.1} parent=1 // pred_region
      %s26 = ssub.s32 1024, 1024
      %27 = vsyncadd [#allocation6], %s26
      %s28 = sshll.u32 [#allocation5], 4
      %s29 = int_to_ptr.vmem [resolvable:$true] %s28
      %34 = dma.hbm_to_vmem [thread:$0]  %s1, 1024, %s29, [#allocation6], 128, 128, 8
    $region9: #{tpu_custom_call.1} parent=1 // pred_fallthru
      _
    // Predicated region
    $region10: #{tpu_custom_call.1} parent=1 // pred_check
      _
    $region11: #{tpu_custom_call.1} parent=1 // pred_check_branch
      %36 = sbr.rel (0) target = $region13
    $region12: #{tpu_custom_call.1} parent=1 // pred_region
      _
    $region13: #{tpu_custom_call.1} parent=1 // pred_fallthru
      _
    // Predicated region
    $region14: #{tpu_custom_call.1} parent=1 // pred_check
      _
    $region15: #{tpu_custom_call.1} parent=1 // pred_check_branch
      %38 = sbr.rel (0) target = $region17
    $region16: #{tpu_custom_call.1} parent=1 // pred_region
      %39 = dma.done [#allocation3], 512
    $region17: #{tpu_custom_call.1} parent=1 // pred_fallthru
      _
    // Predicated region
    $region18: #{tpu_custom_call.1} parent=1 // pred_check
      _
    $region19: #{tpu_custom_call.1} parent=1 // pred_check_branch
      %41 = sbr.rel (0) target = $region21
    $region20: #{tpu_custom_call.1} parent=1 // pred_region
      %42 = dma.done [#allocation6], 1024
    $region21: #{tpu_custom_call.1} parent=1 // pred_fallthru
      _
    %v43 = vld [vmem:[#allocation2] sm:$0xff]
    %v44 = vld [vmem:[#allocation2 + $0x8] sm:$0xff]
    %v45 = vld [vmem:[#allocation2 + $0x10] sm:$0xff]
    %v46 = vld [vmem:[#allocation2 + $0x18] sm:$0xff]
    %v47 = vld [vmem:[#allocation5] sm:$0xff]
    %v48 = vld [vmem:[#allocation5 + $0x8] sm:$0xff]
    %v49 = vld [vmem:[#allocation5 + $0x10] sm:$0xff]
    %v50 = vld [vmem:[#allocation5 + $0x18] sm:$0xff]
    %v51 = vld [vmem:[#allocation5 + $0x20] sm:$0xff]
    %v52 = vld [vmem:[#allocation5 + $0x28] sm:$0xff]
    %v53 = vld [vmem:[#allocation5 + $0x30] sm:$0xff]
    %v54 = vld [vmem:[#allocation5 + $0x38] sm:$0xff]
    %v55 = vld [vmem:[%s2] sm:$0x1]
    %v57 = vlaneseq
    %v58 = vshrl.u32 %v57, 7
    %v59 = vsub.s32 0, %v58
    %v60 = vrot.slane %v55, %v59
    %vm62 = vcmask 523264
    %v64 = vsel %vm62, %v43, 0
    %v67 = vsel %vm62, %v44, 0
    %v70 = vsel %vm62, %v45, 0
    %v73 = vsel %vm62, %v46, 0
    %75 = vmatprep.subr.mxu0 0.0
    %76 = vmatpush1.msra.mxu0 %v47
    %77 = vmatprep.subr.mxu0 0.0
    %78 = vmatpush1.msra.mxu0 %v48
    %79 = vmatprep.subr.mxu0 0.0
    %80 = vmatpush1.msra.mxu0 %v49
    %81 = vmatprep.subr.mxu0 0.0
    %82 = vmatpush1.msra.mxu0 %v50
    %83 = vmatprep.subr.mxu0 0.0
    %84 = vmatpush1.msra.mxu0 %v51
    %85 = vmatprep.subr.mxu0 0.0
    %86 = vmatpush1.msra.mxu0 %v52
    %87 = vmatprep.subr.mxu0 0.0
    %88 = vmatpush1.msra.mxu0 %v53
    %89 = vmatprep.subr.mxu0 0.0
    %90 = vmatpush1.msra.mxu0 %v54
    %91 = vmatprep.subr.mxu0 0.0
    %92 = vmatpush1.msra.mxu0 0.0
    %93 = vmatprep.subr.mxu0 0.0
    %94 = vmatpush1.msra.mxu0 0.0
    %95 = vmatprep.subr.mxu0 0.0
    %96 = vmatpush1.msra.mxu0 0.0
    %97 = vmatprep.subr.mxu0 0.0
    %98 = vmatpush1.msra.mxu0 0.0
    %99 = vmatprep.subr.mxu0 0.0
    %100 = vmatpush1.msra.mxu0 0.0
    %101 = vmatprep.subr.mxu0 0.0
    %102 = vmatpush1.msra.mxu0 0.0
    %103 = vmatprep.subr.mxu0 0.0
    %104 = vmatpush1.msra.mxu0 0.0
    %105 = vmatprep.subr.mxu0 0.0
    %106 = vmatpush1.msra.mxu0 0.0
    %107 = vmatprep.subr.mxu0 0.0
    %108 = vmatpush1.msra.mxu0 0.0
    %109 = vmatprep.subr.mxu0 0.0
    %110 = vmatpush1.msra.mxu0 0.0
    %111 = vmatprep.subr.mxu0 0.0
    %112 = vmatpush1.msra.mxu0 0.0
    %113 = vmatprep.subr.mxu0 0.0
    %114 = vmatpush1.msra.mxu0 0.0
    %115 = vmatprep.subr.mxu0 0.0
    %116 = vmatpush1.msra.mxu0 0.0
    %117 = vmatprep.subr.mxu0 0.0
    %118 = vmatpush1.msra.mxu0 0.0
    %119 = vmatprep.subr.mxu0 0.0
    %120 = vmatpush1.msra.mxu0 0.0
    %121 = vmatprep.subr.mxu0 0.0
    %122 = vmatpush1.msra.mxu0 0.0
    %123 = vmatprep.subr.mxu0 0.0
    %124 = vmatpush1.msra.mxu0 0.0
    %125 = vmatprep.subr.mxu0 0.0
    %126 = vmatpush1.msra.mxu0 0.0
    %127 = vmatprep.subr.mxu0 0.0
    %128 = vmatpush1.msra.mxu0 0.0
    %129 = vmatprep.subr.mxu0 0.0
    %130 = vmatpush1.msra.mxu0 0.0
    %131 = vmatprep.subr.mxu0 0.0
    %132 = vmatpush1.msra.mxu0 0.0
    %133 = vmatprep.subr.mxu0 0.0
    %134 = vmatpush1.msra.mxu0 0.0
    %135 = vmatprep.subr.mxu0 0.0
    %136 = vmatpush1.msra.mxu0 0.0
    %137 = vmatprep.subr.mxu0 0.0
    %138 = vmatpush1.msra.mxu0 0.0
    %139 = vmatprep.mubr.f32.mxu0 0.0
    %140 = vmatmul.mubr.f32.gmra.mrb[0].mxu0 %v64
    %v141 = vpop.f32.mrb[0].mxu0
    %v142 = vadd.f32 %v60, %v141
    %v143 = vpop.f32.mrb[0].mxu0
    %144 = vmatprep.mubr.f32.mxu0 0.0
    %145 = vmatmul.mubr.f32.gmra.mrb[0].mxu0 %v67
    %v146 = vpop.f32.mrb[0].mxu0
    %v147 = vadd.f32 %v60, %v146
    %v148 = vpop.f32.mrb[0].mxu0
    %149 = vmatprep.mubr.f32.mxu0 0.0
    %150 = vmatmul.mubr.f32.gmra.mrb[0].mxu0 %v70
    %v151 = vpop.f32.mrb[0].mxu0
    %v152 = vadd.f32 %v60, %v151
    %v153 = vpop.f32.mrb[0].mxu0
    %154 = vmatprep.mubr.f32.mxu0 0.0
    %155 = vmatmul.mubr.f32.gmra.mrb[0].mxu0 %v73
    %v156 = vpop.f32.mrb[0].mxu0
    %v157 = vadd.f32 %v60, %v156
    %v158 = vpop.f32.mrb[0].mxu0
    %159 = vdwg.mxu0
    %160 = vst [vmem:[#allocation7] sm:$0xff] %v142
    %161 = vst [vmem:[#allocation7 + $0x8] sm:$0xff] %v147
    %162 = vst [vmem:[#allocation7 + $0x10] sm:$0xff] %v152
    %163 = vst [vmem:[#allocation7 + $0x18] sm:$0xff] %v157
    // Predicated region
    $region22: #{tpu_custom_call.1} parent=1 // pred_check
      _
    $region23: #{tpu_custom_call.1} parent=1 // pred_check_branch
      %165 = sbr.rel (0) target = $region25
    $region24: #{tpu_custom_call.1} parent=1 // pred_region
      %s167 = ssub.s32 512, 512
      %168 = vsyncadd [#allocation4], %s167
      %s169 = sshll.u32 [#allocation7], 4
      %s170 = int_to_ptr.vmem [resolvable:$true] %s169
      %175 = dma.vmem_to_hbm [thread:$0]  %s170, 512, %s3, [#allocation4], 128, 128, 8
    $region25: #{tpu_custom_call.1} parent=1 // pred_fallthru
      _
    // Predicated region
    $region26: #{tpu_custom_call.1} parent=1 // pred_check
      _
    $region27: #{tpu_custom_call.1} parent=1 // pred_check_branch
      %177 = sbr.rel (0) target = $region29
    $region28: #{tpu_custom_call.1} parent=1 // pred_region
      %178 = dma.done [#allocation4], 512
    $region29: #{tpu_custom_call.1} parent=1 // pred_fallthru
      _
    %179 = vsyncpa [#allocation3], 1
    %180 = vsyncpa [#allocation6], 1
    %181 = vsyncpa [#allocation4], 1

</llo_original>
